<compile_context>
chip_gen: v7x
topology: tpu7x:2x2x1
jax: 0.10.0
libtpu: 0.0.40
codegen_flags: <defaults>
</compile_context>

<pallas_src>
import functools

import jax
import jax.numpy as jnp
from jax.experimental import pallas as pl
from jax.experimental.pallas import tpu as pltpu


def attention_kernel(x_ref, w_ref, o_ref, *, key_channels, batch, seq_len):
    # x_ref : (C_in, B*T)   w_ref : (2K+O, C_in)   o_ref : (B, O, T)
    Kc = key_channels
    T = seq_len

    # One fused Q/K/V projection for ALL batches (single MXU push, lane dim
    # B*T).  Contraction is W's last dim against x's first dim, so no weight
    # transpose is needed in-kernel.
    qkv = jnp.dot(w_ref[...], x_ref[...],
                  preferred_element_type=jnp.float32)            # (2K+O, B*T)

    for b in range(batch):                                       # static, tiny
        cols = slice(b * T, (b + 1) * T)
        q = qkv[:Kc, cols]                                       # (K, T)
        k = qkv[Kc:2 * Kc, cols]                                 # (K, T)
        v = qkv[2 * Kc:, cols]                                   # (O, T)

        # Scores S[tq, tk] = sum_k Q[k, tq] * K[k, tk]; softmax over keys.
        s = jnp.dot(q.T, k, preferred_element_type=jnp.float32)  # (T, T)
        s = s - jnp.max(s, axis=-1, keepdims=True)               # stable softmax
        p = jnp.exp(s)
        # approx=True (EUP vrcp) is essentially free but changes numerics past
        # the 1e-5 f32 reference check, so keep the exact divide here.
        p = p * pl.reciprocal(jnp.sum(p, axis=-1, keepdims=True), approx=False)

        # out[o, tq] = sum_tk V[o, tk] * P[tq, tk] -> (O, T), stored straight
        # into the (B, O, T) slab (module's native NCW layout).
        out = jax.lax.dot_general(
            v, p, (((1,), (1,)), ((), ())),
            preferred_element_type=jnp.float32)
        o_ref[b] = out.astype(o_ref.dtype)


def fuse_qkv_weights(w_q, w_k, w_v):
    """Fuse the three 1x1-conv weights ONCE at setup (not per forward call)."""
    return jnp.concatenate([w_q, w_k, w_v], axis=0)              # (2K+O, C_in)


@functools.partial(jax.jit, static_argnames=("key_channels",))
def attention_layer(x_nct, w_qkv, *, key_channels):
    """x_nct: (B, C_in, T) (PyTorch NCW). Returns (B, O, T) like the module."""
    B, C_in, T = x_nct.shape
    Oc = w_qkv.shape[0] - 2 * key_channels

    # Relayout x to (C_in, B*T) so the QKV projection is one matmul over every
    # batch at once (512 B; fused into the same jit executable, not a separate
    # dispatch).
    x_cbt = jnp.transpose(x_nct, (1, 0, 2)).reshape(C_in, B * T)

    kernel = functools.partial(
        attention_kernel, key_channels=key_channels, batch=B, seq_len=T)

    # Single grid step: everything fits VMEM trivially and the ~0.35us/step
    # pipeline overhead dominates at these shapes.  For large T this should
    # become a flash-style (q, kv) grid with online softmax, with tiles
    # budgeted against v7x's 64 MiB physical / 32 MiB scoped VMEM (not v6e's
    # 128 MiB) via pltpu.CompilerParams(vmem_limit_bytes=...).
    return pl.pallas_call(
        kernel,
        out_shape=jax.ShapeDtypeStruct((B, Oc, T), jnp.float32),
        grid_spec=pltpu.PrefetchScalarGridSpec(
            num_scalar_prefetch=0,
            grid=(1,),
            in_specs=[
                pl.BlockSpec((C_in, B * T), lambda i: (0, 0)),
                pl.BlockSpec((2 * key_channels + Oc, C_in), lambda i: (0, 0)),
            ],
            out_specs=pl.BlockSpec((B, Oc, T), lambda i: (0, 0, 0)),
        ),
        compiler_params=pltpu.CompilerParams(
            dimension_semantics=("arbitrary",)),
    )(x_cbt, w_qkv)


def reference(x_nct, w_q, w_k, w_v):
    # Pure-JAX mirror of the PyTorch forward.
    Q = jnp.einsum('kc,bct->bkt', w_q, x_nct)
    K = jnp.einsum('kc,bct->bkt', w_k, x_nct)
    V = jnp.einsum('oc,bct->bot', w_v, x_nct)
    A = jax.nn.softmax(jnp.einsum('bkq,bkt->bqt', Q, K), axis=2)
    return jnp.einsum('bqt,bot->boq', A, V)


if __name__ == "__main__":
    # Shapes consistent with the module: batch=2, in_channels=4,
    # key_channels=8, out_channels=8, sequence length T=16.
    B, C_in, T = 2, 4, 16
    key_channels, out_channels = 8, 8

    root = jax.random.PRNGKey(0)
    kx, kq, kk, kv = jax.random.split(root, 4)

    x = jax.random.normal(kx, (B, C_in, T), dtype=jnp.float32)
    # "Conv1d(kernel_size=1, bias=False)" weights: shape (out_ch, in_ch).
    w_q = jax.random.normal(kq, (key_channels, C_in), dtype=jnp.float32) * 0.5
    w_k = jax.random.normal(kk, (key_channels, C_in), dtype=jnp.float32) * 0.5
    w_v = jax.random.normal(kv, (out_channels, C_in), dtype=jnp.float32) * 0.5

    # Hoisted out of the per-call path (perf review): fuse QKV weights once.
    w_qkv = jax.block_until_ready(fuse_qkv_weights(w_q, w_k, w_v))

    out = jax.block_until_ready(
        attention_layer(x, w_qkv, key_channels=key_channels))
    ref = reference(x, w_q, w_k, w_v)

    assert out.shape == (B, out_channels, T), out.shape
    assert jnp.allclose(out, ref, atol=1e-5, rtol=1e-5), "mismatch vs reference"
    print("KERNEL_OK")
</pallas_src>

<mosaic_0001>
module attributes {stable_mosaic.version = 11 : i64} {
  func.func @attention_kernel(%arg0: i32, %arg1: memref<4x32xf32, #tpu.memory_space<vmem>>, %arg2: memref<24x4xf32, #tpu.memory_space<vmem>>, %arg3: memref<2x8x16xf32, #tpu.memory_space<vmem>>) attributes {dimension_semantics = [#tpu.dimension_semantics<arbitrary>], iteration_bounds = array<i64: 1>, scalar_prefetch = 0 : i64, scratch_operands = 0 : i64, tpu.core_type = #tpu.core_type<tc>, window_params = [{pipeline_mode = #tpu.pipeline_mode<synchronous>, transform_indices = @transform_0, window_bounds = array<i64: 4, 32>}, {pipeline_mode = #tpu.pipeline_mode<synchronous>, transform_indices = @transform_1, window_bounds = array<i64: 24, 4>}, {pipeline_mode = #tpu.pipeline_mode<synchronous>, transform_indices = @transform_2, window_bounds = array<i64: 2, 8, 16>}]} {
    %c0 = arith.constant 0 : index
    %c0_0 = arith.constant 0 : index
    %0 = vector.load %arg2[%c0, %c0_0] : memref<24x4xf32, #tpu.memory_space<vmem>>, vector<24x4xf32>
    %c0_1 = arith.constant 0 : index
    %c0_2 = arith.constant 0 : index
    %1 = vector.load %arg1[%c0_1, %c0_2] : memref<4x32xf32, #tpu.memory_space<vmem>>, vector<4x32xf32>
    %cst = arith.constant dense<0.000000e+00> : vector<24x32xf32>
    %2 = tpu.matmul %0, %1, %cst {dimension_numbers = #tpu.dot_dimension_numbers<[1], [0], [0], [1], [0, 0, 1, 1], [], []>} : vector<24x4xf32>, vector<4x32xf32>, vector<24x32xf32> -> vector<24x32xf32>
    %3 = vector.extract_strided_slice %2 {offsets = [0, 0], sizes = [8, 16], strides = [1, 1]} : vector<24x32xf32> to vector<8x16xf32>
    %4 = vector.extract_strided_slice %2 {offsets = [8, 0], sizes = [8, 16], strides = [1, 1]} : vector<24x32xf32> to vector<8x16xf32>
    %5 = vector.extract_strided_slice %2 {offsets = [16, 0], sizes = [8, 16], strides = [1, 1]} : vector<24x32xf32> to vector<8x16xf32>
    %6 = tpu.transpose %3, [1, 0] : vector<8x16xf32> -> vector<16x8xf32>
    %cst_3 = arith.constant dense<0.000000e+00> : vector<16x16xf32>
    %7 = tpu.matmul %6, %4, %cst_3 {dimension_numbers = #tpu.dot_dimension_numbers<[1], [0], [0], [1], [0, 0, 1, 1], [], []>} : vector<16x8xf32>, vector<8x16xf32>, vector<16x16xf32> -> vector<16x16xf32>
    %cst_4 = arith.constant dense<0xFF800000> : vector<16xf32>
    %8 = vector.multi_reduction <maximumf>, %7, %cst_4 [1] : vector<16x16xf32> to vector<16xf32>
    %9 = vector.shape_cast %8 : vector<16xf32> to vector<16x1xf32>
    %10 = vector.broadcast %9 : vector<16x1xf32> to vector<16x16xf32>
    %11 = arith.subf %7, %10 : vector<16x16xf32>
    %12 = math.exp %11 : vector<16x16xf32>
    %cst_5 = arith.constant dense<0.000000e+00> : vector<16xf32>
    %13 = vector.multi_reduction <add>, %12, %cst_5 [1] : vector<16x16xf32> to vector<16xf32>
    %14 = vector.shape_cast %13 : vector<16xf32> to vector<16x1xf32>
    %15 = tpu.reciprocal %14 : vector<16x1xf32> -> vector<16x1xf32>
    %16 = vector.broadcast %15 : vector<16x1xf32> to vector<16x16xf32>
    %17 = arith.mulf %12, %16 : vector<16x16xf32>
    %cst_6 = arith.constant dense<0.000000e+00> : vector<8x16xf32>
    %18 = tpu.matmul %5, %17, %cst_6 {dimension_numbers = #tpu.dot_dimension_numbers<[1], [1], [0], [0], [0, 0, 1, 0], [], []>} : vector<8x16xf32>, vector<16x16xf32>, vector<8x16xf32> -> vector<8x16xf32>
    %c0_7 = arith.constant 0 : index
    %c0_8 = arith.constant 0 : index
    %c0_9 = arith.constant 0 : index
    %19 = vector.load %arg3[%c0_7, %c0_8, %c0_9] : memref<2x8x16xf32, #tpu.memory_space<vmem>>, vector<1x8x16xf32>
    %20 = vector.shape_cast %19 : vector<1x8x16xf32> to vector<8x16xf32>
    %21 = vector.shape_cast %18 : vector<8x16xf32> to vector<1x8x16xf32>
    tpu.vector_store %arg3[%c0_7, %c0_8, %c0_9], %21 {strides = array<i32>} : memref<2x8x16xf32, #tpu.memory_space<vmem>>, vector<1x8x16xf32>,
    %22 = vector.extract_strided_slice %2 {offsets = [0, 16], sizes = [8, 16], strides = [1, 1]} : vector<24x32xf32> to vector<8x16xf32>
    %23 = vector.extract_strided_slice %2 {offsets = [8, 16], sizes = [8, 16], strides = [1, 1]} : vector<24x32xf32> to vector<8x16xf32>
    %24 = vector.extract_strided_slice %2 {offsets = [16, 16], sizes = [8, 16], strides = [1, 1]} : vector<24x32xf32> to vector<8x16xf32>
    %25 = tpu.transpose %22, [1, 0] : vector<8x16xf32> -> vector<16x8xf32>
    %cst_10 = arith.constant dense<0.000000e+00> : vector<16x16xf32>
    %26 = tpu.matmul %25, %23, %cst_10 {dimension_numbers = #tpu.dot_dimension_numbers<[1], [0], [0], [1], [0, 0, 1, 1], [], []>} : vector<16x8xf32>, vector<8x16xf32>, vector<16x16xf32> -> vector<16x16xf32>
    %cst_11 = arith.constant dense<0xFF800000> : vector<16xf32>
    %27 = vector.multi_reduction <maximumf>, %26, %cst_11 [1] : vector<16x16xf32> to vector<16xf32>
    %28 = vector.shape_cast %27 : vector<16xf32> to vector<16x1xf32>
    %29 = vector.broadcast %28 : vector<16x1xf32> to vector<16x16xf32>
    %30 = arith.subf %26, %29 : vector<16x16xf32>
    %31 = math.exp %30 : vector<16x16xf32>
    %cst_12 = arith.constant dense<0.000000e+00> : vector<16xf32>
    %32 = vector.multi_reduction <add>, %31, %cst_12 [1] : vector<16x16xf32> to vector<16xf32>
    %33 = vector.shape_cast %32 : vector<16xf32> to vector<16x1xf32>
    %34 = tpu.reciprocal %33 : vector<16x1xf32> -> vector<16x1xf32>
    %35 = vector.broadcast %34 : vector<16x1xf32> to vector<16x16xf32>
    %36 = arith.mulf %31, %35 : vector<16x16xf32>
    %cst_13 = arith.constant dense<0.000000e+00> : vector<8x16xf32>
    %37 = tpu.matmul %24, %36, %cst_13 {dimension_numbers = #tpu.dot_dimension_numbers<[1], [1], [0], [0], [0, 0, 1, 0], [], []>} : vector<8x16xf32>, vector<16x16xf32>, vector<8x16xf32> -> vector<8x16xf32>
    %c1 = arith.constant 1 : index
    %c0_14 = arith.constant 0 : index
    %c0_15 = arith.constant 0 : index
    %38 = vector.load %arg3[%c1, %c0_14, %c0_15] : memref<2x8x16xf32, #tpu.memory_space<vmem>>, vector<1x8x16xf32>
    %39 = vector.shape_cast %38 : vector<1x8x16xf32> to vector<8x16xf32>
    %40 = vector.shape_cast %37 : vector<8x16xf32> to vector<1x8x16xf32>
    tpu.vector_store %arg3[%c1, %c0_14, %c0_15], %40 {strides = array<i32>} : memref<2x8x16xf32, #tpu.memory_space<vmem>>, vector<1x8x16xf32>,
    return
  }
  func.func @transform_0(%arg0: i32) -> (i32, i32) {
    %c0_i32 = arith.constant 0 : i32
    %c0_i32_0 = arith.constant 0 : i32
    %c0_i32_1 = arith.constant 0 : i32
    return %c0_i32, %c0_i32_0 : i32, i32
  }
  func.func @transform_1(%arg0: i32) -> (i32, i32) {
    %c0_i32 = arith.constant 0 : i32
    %c0_i32_0 = arith.constant 0 : i32
    %c0_i32_1 = arith.constant 0 : i32
    return %c0_i32, %c0_i32_0 : i32, i32
  }
  func.func @transform_2(%arg0: i32) -> (i32, i32, i32) {
    %c0_i32 = arith.constant 0 : i32
    %c0_i32_0 = arith.constant 0 : i32
    %c0_i32_1 = arith.constant 0 : i32
    %c0_i32_2 = arith.constant 0 : i32
    return %c0_i32, %c0_i32_0, %c0_i32_1 : i32, i32, i32
  }
}

</mosaic_0001>

<llo_original>
// kernel: attention_layer.1
$region0: #{attention_layer.1}
  #allocation0 [shape = 'u32[]', space=smem, size = 0x4, offset = 0x4, fixed_abs, tag = 'smem constant byte address 0x4 - core index']
  #allocation1 [shape = 'u32[144,128]{1,0:T(1,128)}', space=vmem, size = 0x12000, scoped, tag = 'internal scratch']
  %s0 = inlined_call_operand.vmem [shape: f32[4,32], index: 0, kind: input, shape index: {}]
  %s1 = inlined_call_operand.vmem [shape: f32[24,4], index: 1, kind: input, shape index: {}]
  %s2 = inlined_call_operand.hbm [shape: f32[2,8,16], index: 2, kind: output, shape index: {}]
  %s3 = sld [smem:[#allocation0]]
  $region18: #{attention_layer.1} parent=0
    _
  %s5 = ssub.s32 1, %s3
  %s6 = scalar_select 0, %s5, %s3
  $region1: #{attention_layer.1} parent=0
    #allocation2 [shape = 'u8[8192]{0}', space=vmem, size = 0x2000, scoped, tag = 'output window, operand 0, single buffered']
    #allocation3 [shape = 's32[1]{0}', space=sflag, size = 0x4, scoped, tag = 'scoped memory for attention_layer.1']
    %7 = vsyncpa [#allocation3], 0
    // Predicated region
    $region2: #{attention_layer.1} parent=1 // pred_check
      _
    $region3: #{attention_layer.1} parent=1 // pred_check_branch
      %9 = sbr.rel (0) target = $region5
    $region4: #{attention_layer.1} parent=1 // pred_region
      _
    $region5: #{attention_layer.1} parent=1 // pred_fallthru
      _
    // Predicated region
    $region6: #{attention_layer.1} parent=1 // pred_check
      _
    $region7: #{attention_layer.1} parent=1 // pred_check_branch
      %11 = sbr.rel (0) target = $region9
    $region8: #{attention_layer.1} parent=1 // pred_region
      _
    $region9: #{attention_layer.1} parent=1 // pred_fallthru
      _
    %v12 = vld [vmem:[%s1] sm:$0xff]
    %v13 = vld [vmem:[%s1 + $0x8] sm:$0xff]
    %v14 = vld [vmem:[%s1 + $0x10] sm:$0xff]
    %v15 = vld [vmem:[%s0] sm:$0xf]
    %vm16 = vcmask 31744
    %v18 = vsel %vm16, %v12, 0
    %v21 = vsel %vm16, %v13, 0
    %v24 = vsel %vm16, %v14, 0
    %vm26 = vcmask 1043456
    %v28 = vsel %vm26, %v15, 0
    %30 = vmatprep.subr.mxu0 0.0
    %31 = vmatpush1.msra.mxu0 %v28
    %32 = vmatprep.subr.mxu0 0.0
    %33 = vmatpush1.msra.mxu0 0.0
    %34 = vmatprep.subr.mxu0 0.0
    %35 = vmatpush1.msra.mxu0 0.0
    %36 = vmatprep.subr.mxu0 0.0
    %37 = vmatpush1.msra.mxu0 0.0
    %38 = vmatprep.subr.mxu0 0.0
    %39 = vmatpush1.msra.mxu0 0.0
    %40 = vmatprep.subr.mxu0 0.0
    %41 = vmatpush1.msra.mxu0 0.0
    %42 = vmatprep.subr.mxu0 0.0
    %43 = vmatpush1.msra.mxu0 0.0
    %44 = vmatprep.subr.mxu0 0.0
    %45 = vmatpush1.msra.mxu0 0.0
    %46 = vmatprep.subr.mxu0 0.0
    %47 = vmatpush1.msra.mxu0 0.0
    %48 = vmatprep.subr.mxu0 0.0
    %49 = vmatpush1.msra.mxu0 0.0
    %50 = vmatprep.subr.mxu0 0.0
    %51 = vmatpush1.msra.mxu0 0.0
    %52 = vmatprep.subr.mxu0 0.0
    %53 = vmatpush1.msra.mxu0 0.0
    %54 = vmatprep.subr.mxu0 0.0
    %55 = vmatpush1.msra.mxu0 0.0
    %56 = vmatprep.subr.mxu0 0.0
    %57 = vmatpush1.msra.mxu0 0.0
    %58 = vmatprep.subr.mxu0 0.0
    %59 = vmatpush1.msra.mxu0 0.0
    %60 = vmatprep.subr.mxu0 0.0
    %61 = vmatpush1.msra.mxu0 0.0
    %62 = vmatprep.subr.mxu0 0.0
    %63 = vmatpush1.msra.mxu0 0.0
    %64 = vmatprep.subr.mxu0 0.0
    %65 = vmatpush1.msra.mxu0 0.0
    %66 = vmatprep.subr.mxu0 0.0
    %67 = vmatpush1.msra.mxu0 0.0
    %68 = vmatprep.subr.mxu0 0.0
    %69 = vmatpush1.msra.mxu0 0.0
    %70 = vmatprep.subr.mxu0 0.0
    %71 = vmatpush1.msra.mxu0 0.0
    %72 = vmatprep.subr.mxu0 0.0
    %73 = vmatpush1.msra.mxu0 0.0
    %74 = vmatprep.subr.mxu0 0.0
    %75 = vmatpush1.msra.mxu0 0.0
    %76 = vmatprep.subr.mxu0 0.0
    %77 = vmatpush1.msra.mxu0 0.0
    %78 = vmatprep.subr.mxu0 0.0
    %79 = vmatpush1.msra.mxu0 0.0
    %80 = vmatprep.subr.mxu0 0.0
    %81 = vmatpush1.msra.mxu0 0.0
    %82 = vmatprep.subr.mxu0 0.0
    %83 = vmatpush1.msra.mxu0 0.0
    %84 = vmatprep.subr.mxu0 0.0
    %85 = vmatpush1.msra.mxu0 0.0
    %86 = vmatprep.subr.mxu0 0.0
    %87 = vmatpush1.msra.mxu0 0.0
    %88 = vmatprep.subr.mxu0 0.0
    %89 = vmatpush1.msra.mxu0 0.0
    %90 = vmatprep.subr.mxu0 0.0
    %91 = vmatpush1.msra.mxu0 0.0
    %92 = vmatprep.subr.mxu0 0.0
    %93 = vmatpush1.msra.mxu0 0.0
    %94 = vmatprep.mubr.f32.mxu0 0.0
    %95 = vmatmul.mubr.f32.gmra.mrb[0].mxu0 %v18
    %v96 = vpop.f32.mrb[0].mxu0
    %v97 = vadd.f32 0.0, %v96
    %v98 = vpop.f32.mrb[0].mxu0
    %99 = vmatprep.mubr.f32.mxu0 0.0
    %100 = vmatmul.mubr.f32.gmra.mrb[0].mxu0 %v21
    %v101 = vpop.f32.mrb[0].mxu0
    %v102 = vadd.f32 0.0, %v101
    %v103 = vpop.f32.mrb[0].mxu0
    %104 = vmatprep.mubr.f32.mxu0 0.0
    %105 = vmatmul.mubr.f32.gmra.mrb[0].mxu0 %v24
    %v106 = vpop.f32.mrb[0].mxu0
    %v107 = vadd.f32 0.0, %v106
    %v108 = vpop.f32.mrb[0].mxu0
    %109 = vdwg.mxu0
    %110 = vxpose.xlu0.b32.start [1/16] %v97, 128
    %111 = vxpose.xlu0.b32.cont [2/16] 0.0, 128
    %112 = vxpose.xlu0.b32.cont [3/16] 0.0, 128
    %113 = vxpose.xlu0.b32.cont [4/16] 0.0, 128
    %114 = vxpose.xlu0.b32.cont [5/16] 0.0, 128
    %115 = vxpose.xlu0.b32.cont [6/16] 0.0, 128
    %116 = vxpose.xlu0.b32.cont [7/16] 0.0, 128
    %117 = vxpose.xlu0.b32.cont [8/16] 0.0, 128
    %118 = vxpose.xlu0.b32.cont [9/16] 0.0, 128
    %119 = vxpose.xlu0.b32.cont [10/16] 0.0, 128
    %120 = vxpose.xlu0.b32.cont [11/16] 0.0, 128
    %121 = vxpose.xlu0.b32.cont [12/16] 0.0, 128
    %122 = vxpose.xlu0.b32.cont [13/16] 0.0, 128
    %123 = vxpose.xlu0.b32.cont [14/16] 0.0, 128
    %124 = vxpose.xlu0.b32.cont [15/16] 0.0, 128
    %125 = vxpose.xlu0.b32.end [16/16] 0.0, 128
    %v126 = vpop.trf.xlu0
    %v127 = vpop.trf.xlu0
    %v128 = vpop.trf.xlu0
    %v129 = vpop.trf.xlu0
    %v130 = vpop.trf.xlu0
    %v131 = vpop.trf.xlu0
    %v132 = vpop.trf.xlu0
    %v133 = vpop.trf.xlu0
    %v134 = vpop.trf.xlu0
    %v135 = vpop.trf.xlu0
    %v136 = vpop.trf.xlu0
    %v137 = vpop.trf.xlu0
    %v138 = vpop.trf.xlu0
    %v139 = vpop.trf.xlu0
    %v140 = vpop.trf.xlu0
    %v141 = vpop.trf.xlu0
    %vm142 = vcmask 64512
    %v144 = vsel %vm142, %v126, 0
    %v147 = vsel %vm142, %v127, 0
    %149 = vmatprep.subr.mxu0 0.0
    %150 = vmatpush1.msra.mxu0 %v102
    %151 = vmatprep.subr.mxu0 0.0
    %152 = vmatpush1.msra.mxu0 0.0
    %153 = vmatprep.subr.mxu0 0.0
    %154 = vmatpush1.msra.mxu0 0.0
    %155 = vmatprep.subr.mxu0 0.0
    %156 = vmatpush1.msra.mxu0 0.0
    %157 = vmatprep.subr.mxu0 0.0
    %158 = vmatpush1.msra.mxu0 0.0
    %159 = vmatprep.subr.mxu0 0.0
    %160 = vmatpush1.msra.mxu0 0.0
    %161 = vmatprep.subr.mxu0 0.0
    %162 = vmatpush1.msra.mxu0 0.0
    %163 = vmatprep.subr.mxu0 0.0
    %164 = vmatpush1.msra.mxu0 0.0
    %165 = vmatprep.subr.mxu0 0.0
    %166 = vmatpush1.msra.mxu0 0.0
    %167 = vmatprep.subr.mxu0 0.0
    %168 = vmatpush1.msra.mxu0 0.0
    %169 = vmatprep.subr.mxu0 0.0
    %170 = vmatpush1.msra.mxu0 0.0
    %171 = vmatprep.subr.mxu0 0.0
    %172 = vmatpush1.msra.mxu0 0.0
    %173 = vmatprep.subr.mxu0 0.0
    %174 = vmatpush1.msra.mxu0 0.0
    %175 = vmatprep.subr.mxu0 0.0
    %176 = vmatpush1.msra.mxu0 0.0
    %177 = vmatprep.subr.mxu0 0.0
    %178 = vmatpush1.msra.mxu0 0.0
    %179 = vmatprep.subr.mxu0 0.0
    %180 = vmatpush1.msra.mxu0 0.0
    %181 = vmatprep.subr.mxu0 0.0
    %182 = vmatpush1.msra.mxu0 0.0
    %183 = vmatprep.subr.mxu0 0.0
    %184 = vmatpush1.msra.mxu0 0.0
    %185 = vmatprep.subr.mxu0 0.0
    %186 = vmatpush1.msra.mxu0 0.0
    %187 = vmatprep.subr.mxu0 0.0
    %188 = vmatpush1.msra.mxu0 0.0
    %189 = vmatprep.subr.mxu0 0.0
    %190 = vmatpush1.msra.mxu0 0.0
    %191 = vmatprep.subr.mxu0 0.0
    %192 = vmatpush1.msra.mxu0 0.0
    %193 = vmatprep.subr.mxu0 0.0
    %194 = vmatpush1.msra.mxu0 0.0
    %195 = vmatprep.subr.mxu0 0.0
    %196 = vmatpush1.msra.mxu0 0.0
    %197 = vmatprep.subr.mxu0 0.0
    %198 = vmatpush1.msra.mxu0 0.0
    %199 = vmatprep.subr.mxu0 0.0
    %200 = vmatpush1.msra.mxu0 0.0
    %201 = vmatprep.subr.mxu0 0.0
    %202 = vmatpush1.msra.mxu0 0.0
    %203 = vmatprep.subr.mxu0 0.0
    %204 = vmatpush1.msra.mxu0 0.0
    %205 = vmatprep.subr.mxu0 0.0
    %206 = vmatpush1.msra.mxu0 0.0
    %207 = vmatprep.subr.mxu0 0.0
    %208 = vmatpush1.msra.mxu0 0.0
    %209 = vmatprep.subr.mxu0 0.0
    %210 = vmatpush1.msra.mxu0 0.0
    %211 = vmatprep.subr.mxu0 0.0
    %212 = vmatpush1.msra.mxu0 0.0
    %213 = vmatprep.mubr.f32.mxu0 0.0
    %214 = vmatmul.mubr.f32.gmra.mrb[0].mxu0 %v144
    %v215 = vpop.f32.mrb[0].mxu0
    %v216 = vadd.f32 0.0, %v215
    %v217 = vpop.f32.mrb[0].mxu0
    %218 = vmatprep.mubr.f32.mxu0 0.0
    %219 = vmatmul.mubr.f32.gmra.mrb[0].mxu0 %v147
    %v220 = vpop.f32.mrb[0].mxu0
    %v221 = vadd.f32 0.0, %v220
    %v222 = vpop.f32.mrb[0].mxu0
    %223 = vdwg.mxu0
    %vm224 = vcmask 130048
    %v225 = vsel %vm224, %v216, -inf
    %226 = vmax.xlane.f32.xlu0 %v225
    %v227 = vpop.xlane.xlu0 %226
    %v228 = vsel %vm224, %v221, -inf
    %229 = vmax.xlane.f32.xlu0 %v228
    %v230 = vpop.xlane.xlu0 %229
    %v231 = vsub.f32 %v216, %v227
    %v232 = vsub.f32 %v221, %v230
    %v233 = vmul.f32 %v231, 1.442695
    %v234 = vpow.pop %v233
    %v235 = vmul.f32 %v232, 1.442695
    %v236 = vpow.pop %v235
    %v237 = vsel %vm224, %v234, 0.0
    %238 = vadd.xlane.f32.xlu0 %v237
    %v239 = vpop.xlane.xlu0 %238
    %v240 = vsel %vm224, %v236, 0.0
    %241 = vadd.xlane.f32.xlu0 %v240
    %v242 = vpop.xlane.xlu0 %241
    %v243 = vrcp.pop %v239
    %v244 = vrcp.pop %v242
    %v245 = vmul.f32 %v234, %v243
    %v246 = vmul.f32 %v236, %v244
    %v248 = vsel %vm224, %v107, 0
    %v251 = vsel %vm224, %v245, 0
    %v254 = vsel %vm224, %v246, 0
    %256 = vmatprep.subr.mxu0 0.0
    %257 = vmatpush1.xpose.msra.mxu0 %v251
    %258 = vmatprep.subr.mxu0 0.0
    %259 = vmatpush1.xpose.msra.mxu0 %v254
    %260 = vmatprep.subr.mxu0 0.0
    %261 = vmatpush1.xpose.msra.mxu0 0.0
    %262 = vmatprep.subr.mxu0 0.0
    %263 = vmatpush1.xpose.msra.mxu0 0.0
    %264 = vmatprep.subr.mxu0 0.0
    %265 = vmatpush1.xpose.msra.mxu0 0.0
    %266 = vmatprep.subr.mxu0 0.0
    %267 = vmatpush1.xpose.msra.mxu0 0.0
    %268 = vmatprep.subr.mxu0 0.0
    %269 = vmatpush1.xpose.msra.mxu0 0.0
    %270 = vmatprep.subr.mxu0 0.0
    %271 = vmatpush1.xpose.msra.mxu0 0.0
    %272 = vmatprep.subr.mxu0 0.0
    %273 = vmatpush1.xpose.msra.mxu0 0.0
    %274 = vmatprep.subr.mxu0 0.0
    %275 = vmatpush1.xpose.msra.mxu0 0.0
    %276 = vmatprep.subr.mxu0 0.0
    %277 = vmatpush1.xpose.msra.mxu0 0.0
    %278 = vmatprep.subr.mxu0 0.0
    %279 = vmatpush1.xpose.msra.mxu0 0.0
    %280 = vmatprep.subr.mxu0 0.0
    %281 = vmatpush1.xpose.msra.mxu0 0.0
    %282 = vmatprep.subr.mxu0 0.0
    %283 = vmatpush1.xpose.msra.mxu0 0.0
    %284 = vmatprep.subr.mxu0 0.0
    %285 = vmatpush1.xpose.msra.mxu0 0.0
    %286 = vmatprep.subr.mxu0 0.0
    %287 = vmatpush1.xpose.msra.mxu0 0.0
    %288 = vmatprep.subr.mxu0 0.0
    %289 = vmatpush1.xpose.msra.mxu0 0.0
    %290 = vmatprep.subr.mxu0 0.0
    %291 = vmatpush1.xpose.msra.mxu0 0.0
    %292 = vmatprep.subr.mxu0 0.0
    %293 = vmatpush1.xpose.msra.mxu0 0.0
    %294 = vmatprep.subr.mxu0 0.0
    %295 = vmatpush1.xpose.msra.mxu0 0.0
    %296 = vmatprep.subr.mxu0 0.0
    %297 = vmatpush1.xpose.msra.mxu0 0.0
    %298 = vmatprep.subr.mxu0 0.0
    %299 = vmatpush1.xpose.msra.mxu0 0.0
    %300 = vmatprep.subr.mxu0 0.0
    %301 = vmatpush1.xpose.msra.mxu0 0.0
    %302 = vmatprep.subr.mxu0 0.0
    %303 = vmatpush1.xpose.msra.mxu0 0.0
    %304 = vmatprep.subr.mxu0 0.0
    %305 = vmatpush1.xpose.msra.mxu0 0.0
    %306 = vmatprep.subr.mxu0 0.0
    %307 = vmatpush1.xpose.msra.mxu0 0.0
    %308 = vmatprep.subr.mxu0 0.0
    %309 = vmatpush1.xpose.msra.mxu0 0.0
    %310 = vmatprep.subr.mxu0 0.0
    %311 = vmatpush1.xpose.msra.mxu0 0.0
    %312 = vmatprep.subr.mxu0 0.0
    %313 = vmatpush1.xpose.msra.mxu0 0.0
    %314 = vmatprep.subr.mxu0 0.0
    %315 = vmatpush1.xpose.msra.mxu0 0.0
    %316 = vmatprep.subr.mxu0 0.0
    %317 = vmatpush1.xpose.msra.mxu0 0.0
    %318 = vmatprep.subr.mxu0 0.0
    %319 = vmatpush1.xpose.msra.mxu0 0.0
    %320 = vmatprep.mubr.f32.mxu0 0.0
    %321 = vmatmul.mubr.f32.gmra.mrb[0].mxu0 %v248
    %v322 = vpop.f32.mrb[0].mxu0
    %v323 = vadd.f32 0.0, %v322
    %v324 = vpop.f32.mrb[0].mxu0
    %325 = vdwg.mxu0
    %326 = vst.msk [vmem:[#allocation2] sm:$0xff] %vm224, %v323
    %328 = vrot.lane.b32.xlu0 %v97, 112
    %v329 = vpop.permute.xlu0 %328
    %331 = vxpose.xlu0.b32.start [1/16] %v329, 128
    %332 = vxpose.xlu0.b32.cont [2/16] 0.0, 128
    %333 = vxpose.xlu0.b32.cont [3/16] 0.0, 128
    %334 = vxpose.xlu0.b32.cont [4/16] 0.0, 128
    %335 = vxpose.xlu0.b32.cont [5/16] 0.0, 128
    %336 = vxpose.xlu0.b32.cont [6/16] 0.0, 128
    %337 = vxpose.xlu0.b32.cont [7/16] 0.0, 128
    %338 = vxpose.xlu0.b32.cont [8/16] 0.0, 128
    %339 = vxpose.xlu0.b32.cont [9/16] 0.0, 128
    %340 = vxpose.xlu0.b32.cont [10/16] 0.0, 128
    %341 = vxpose.xlu0.b32.cont [11/16] 0.0, 128
    %342 = vxpose.xlu0.b32.cont [12/16] 0.0, 128
    %343 = vxpose.xlu0.b32.cont [13/16] 0.0, 128
    %344 = vxpose.xlu0.b32.cont [14/16] 0.0, 128
    %345 = vxpose.xlu0.b32.cont [15/16] 0.0, 128
    %346 = vxpose.xlu0.b32.end [16/16] 0.0, 128
    %v347 = vpop.trf.xlu0
    %v348 = vpop.trf.xlu0
    %v349 = vpop.trf.xlu0
    %v350 = vpop.trf.xlu0
    %v351 = vpop.trf.xlu0
    %v352 = vpop.trf.xlu0
    %v353 = vpop.trf.xlu0
    %v354 = vpop.trf.xlu0
    %v355 = vpop.trf.xlu0
    %v356 = vpop.trf.xlu0
    %v357 = vpop.trf.xlu0
    %v358 = vpop.trf.xlu0
    %v359 = vpop.trf.xlu0
    %v360 = vpop.trf.xlu0
    %v361 = vpop.trf.xlu0
    %v362 = vpop.trf.xlu0
    %364 = vrot.lane.b32.xlu0 %v102, 112
    %v365 = vpop.permute.xlu0 %364
    %v368 = vsel %vm142, %v347, 0
    %v371 = vsel %vm142, %v348, 0
    %373 = vmatprep.subr.mxu0 0.0
    %374 = vmatpush1.msra.mxu0 %v365
    %375 = vmatprep.subr.mxu0 0.0
    %376 = vmatpush1.msra.mxu0 0.0
    %377 = vmatprep.subr.mxu0 0.0
    %378 = vmatpush1.msra.mxu0 0.0
    %379 = vmatprep.subr.mxu0 0.0
    %380 = vmatpush1.msra.mxu0 0.0
    %381 = vmatprep.subr.mxu0 0.0
    %382 = vmatpush1.msra.mxu0 0.0
    %383 = vmatprep.subr.mxu0 0.0
    %384 = vmatpush1.msra.mxu0 0.0
    %385 = vmatprep.subr.mxu0 0.0
    %386 = vmatpush1.msra.mxu0 0.0
    %387 = vmatprep.subr.mxu0 0.0
    %388 = vmatpush1.msra.mxu0 0.0
    %389 = vmatprep.subr.mxu0 0.0
    %390 = vmatpush1.msra.mxu0 0.0
    %391 = vmatprep.subr.mxu0 0.0
    %392 = vmatpush1.msra.mxu0 0.0
    %393 = vmatprep.subr.mxu0 0.0
    %394 = vmatpush1.msra.mxu0 0.0
    %395 = vmatprep.subr.mxu0 0.0
    %396 = vmatpush1.msra.mxu0 0.0
    %397 = vmatprep.subr.mxu0 0.0
    %398 = vmatpush1.msra.mxu0 0.0
    %399 = vmatprep.subr.mxu0 0.0
    %400 = vmatpush1.msra.mxu0 0.0
    %401 = vmatprep.subr.mxu0 0.0
    %402 = vmatpush1.msra.mxu0 0.0
    %403 = vmatprep.subr.mxu0 0.0
    %404 = vmatpush1.msra.mxu0 0.0
    %405 = vmatprep.subr.mxu0 0.0
    %406 = vmatpush1.msra.mxu0 0.0
    %407 = vmatprep.subr.mxu0 0.0
    %408 = vmatpush1.msra.mxu0 0.0
    %409 = vmatprep.subr.mxu0 0.0
    %410 = vmatpush1.msra.mxu0 0.0
    %411 = vmatprep.subr.mxu0 0.0
    %412 = vmatpush1.msra.mxu0 0.0
    %413 = vmatprep.subr.mxu0 0.0
    %414 = vmatpush1.msra.mxu0 0.0
    %415 = vmatprep.subr.mxu0 0.0
    %416 = vmatpush1.msra.mxu0 0.0
    %417 = vmatprep.subr.mxu0 0.0
    %418 = vmatpush1.msra.mxu0 0.0
    %419 = vmatprep.subr.mxu0 0.0
    %420 = vmatpush1.msra.mxu0 0.0
    %421 = vmatprep.subr.mxu0 0.0
    %422 = vmatpush1.msra.mxu0 0.0
    %423 = vmatprep.subr.mxu0 0.0
    %424 = vmatpush1.msra.mxu0 0.0
    %425 = vmatprep.subr.mxu0 0.0
    %426 = vmatpush1.msra.mxu0 0.0
    %427 = vmatprep.subr.mxu0 0.0
    %428 = vmatpush1.msra.mxu0 0.0
    %429 = vmatprep.subr.mxu0 0.0
    %430 = vmatpush1.msra.mxu0 0.0
    %431 = vmatprep.subr.mxu0 0.0
    %432 = vmatpush1.msra.mxu0 0.0
    %433 = vmatprep.subr.mxu0 0.0
    %434 = vmatpush1.msra.mxu0 0.0
    %435 = vmatprep.subr.mxu0 0.0
    %436 = vmatpush1.msra.mxu0 0.0
    %437 = vmatprep.mubr.f32.mxu0 0.0
    %438 = vmatmul.mubr.f32.gmra.mrb[0].mxu0 %v368
    %v439 = vpop.f32.mrb[0].mxu0
    %v440 = vadd.f32 0.0, %v439
    %v441 = vpop.f32.mrb[0].mxu0
    %442 = vmatprep.mubr.f32.mxu0 0.0
    %443 = vmatmul.mubr.f32.gmra.mrb[0].mxu0 %v371
    %v444 = vpop.f32.mrb[0].mxu0
    %v445 = vadd.f32 0.0, %v444
    %v446 = vpop.f32.mrb[0].mxu0
    %447 = vdwg.mxu0
    %v448 = vsel %vm224, %v440, -inf
    %449 = vmax.xlane.f32.xlu0 %v448
    %v450 = vpop.xlane.xlu0 %449
    %v451 = vsel %vm224, %v445, -inf
    %452 = vmax.xlane.f32.xlu0 %v451
    %v453 = vpop.xlane.xlu0 %452
    %v454 = vsub.f32 %v440, %v450
    %v455 = vsub.f32 %v445, %v453
    %v456 = vmul.f32 %v454, 1.442695
    %v457 = vpow.pop %v456
    %v458 = vmul.f32 %v455, 1.442695
    %v459 = vpow.pop %v458
    %v460 = vsel %vm224, %v457, 0.0
    %461 = vadd.xlane.f32.xlu0 %v460
    %v462 = vpop.xlane.xlu0 %461
    %v463 = vsel %vm224, %v459, 0.0
    %464 = vadd.xlane.f32.xlu0 %v463
    %v465 = vpop.xlane.xlu0 %464
    %v466 = vrcp.pop %v462
    %v467 = vrcp.pop %v465
    %v468 = vmul.f32 %v457, %v466
    %v469 = vmul.f32 %v459, %v467
    %470 = vrot.lane.b32.xlu0 %v107, 112
    %v471 = vpop.permute.xlu0 %470
    %v472 = vsel %vm224, %v471, 0
    %v475 = vsel %vm224, %v468, 0
    %v478 = vsel %vm224, %v469, 0
    %480 = vmatprep.subr.mxu0 0.0
    %481 = vmatpush1.xpose.msra.mxu0 %v475
    %482 = vmatprep.subr.mxu0 0.0
    %483 = vmatpush1.xpose.msra.mxu0 %v478
    %484 = vmatprep.subr.mxu0 0.0
    %485 = vmatpush1.xpose.msra.mxu0 0.0
    %486 = vmatprep.subr.mxu0 0.0
    %487 = vmatpush1.xpose.msra.mxu0 0.0
    %488 = vmatprep.subr.mxu0 0.0
    %489 = vmatpush1.xpose.msra.mxu0 0.0
    %490 = vmatprep.subr.mxu0 0.0
    %491 = vmatpush1.xpose.msra.mxu0 0.0
    %492 = vmatprep.subr.mxu0 0.0
    %493 = vmatpush1.xpose.msra.mxu0 0.0
    %494 = vmatprep.subr.mxu0 0.0
    %495 = vmatpush1.xpose.msra.mxu0 0.0
    %496 = vmatprep.subr.mxu0 0.0
    %497 = vmatpush1.xpose.msra.mxu0 0.0
    %498 = vmatprep.subr.mxu0 0.0
    %499 = vmatpush1.xpose.msra.mxu0 0.0
    %500 = vmatprep.subr.mxu0 0.0
    %501 = vmatpush1.xpose.msra.mxu0 0.0
    %502 = vmatprep.subr.mxu0 0.0
    %503 = vmatpush1.xpose.msra.mxu0 0.0
    %504 = vmatprep.subr.mxu0 0.0
    %505 = vmatpush1.xpose.msra.mxu0 0.0
    %506 = vmatprep.subr.mxu0 0.0
    %507 = vmatpush1.xpose.msra.mxu0 0.0
    %508 = vmatprep.subr.mxu0 0.0
    %509 = vmatpush1.xpose.msra.mxu0 0.0
    %510 = vmatprep.subr.mxu0 0.0
    %511 = vmatpush1.xpose.msra.mxu0 0.0
    %512 = vmatprep.subr.mxu0 0.0
    %513 = vmatpush1.xpose.msra.mxu0 0.0
    %514 = vmatprep.subr.mxu0 0.0
    %515 = vmatpush1.xpose.msra.mxu0 0.0
    %516 = vmatprep.subr.mxu0 0.0
    %517 = vmatpush1.xpose.msra.mxu0 0.0
    %518 = vmatprep.subr.mxu0 0.0
    %519 = vmatpush1.xpose.msra.mxu0 0.0
    %520 = vmatprep.subr.mxu0 0.0
    %521 = vmatpush1.xpose.msra.mxu0 0.0
    %522 = vmatprep.subr.mxu0 0.0
    %523 = vmatpush1.xpose.msra.mxu0 0.0
    %524 = vmatprep.subr.mxu0 0.0
    %525 = vmatpush1.xpose.msra.mxu0 0.0
    %526 = vmatprep.subr.mxu0 0.0
    %527 = vmatpush1.xpose.msra.mxu0 0.0
    %528 = vmatprep.subr.mxu0 0.0
    %529 = vmatpush1.xpose.msra.mxu0 0.0
    %530 = vmatprep.subr.mxu0 0.0
    %531 = vmatpush1.xpose.msra.mxu0 0.0
    %532 = vmatprep.subr.mxu0 0.0
    %533 = vmatpush1.xpose.msra.mxu0 0.0
    %534 = vmatprep.subr.mxu0 0.0
    %535 = vmatpush1.xpose.msra.mxu0 0.0
    %536 = vmatprep.subr.mxu0 0.0
    %537 = vmatpush1.xpose.msra.mxu0 0.0
    %538 = vmatprep.subr.mxu0 0.0
    %539 = vmatpush1.xpose.msra.mxu0 0.0
    %540 = vmatprep.subr.mxu0 0.0
    %541 = vmatpush1.xpose.msra.mxu0 0.0
    %542 = vmatprep.subr.mxu0 0.0
    %543 = vmatpush1.xpose.msra.mxu0 0.0
    %544 = vmatprep.mubr.f32.mxu0 0.0
    %545 = vmatmul.mubr.f32.gmra.mrb[0].mxu0 %v472
    %v546 = vpop.f32.mrb[0].mxu0
    %v547 = vadd.f32 0.0, %v546
    %v548 = vpop.f32.mrb[0].mxu0
    %549 = vdwg.mxu0
    %s550 = scalar_lea.vmem [#allocation2], 8
    %551 = vst.msk [vmem:[%s550] sm:$0xff] %vm224, %v547
    // Predicated region
    $region10: #{attention_layer.1} parent=1 // pred_check
      _
    $region11: #{attention_layer.1} parent=1 // pred_check_branch
      %553 = sbr.rel (0) target = $region13
    $region12: #{attention_layer.1} parent=1 // pred_region
      %s555 = ssub.s32 256, 256
      %556 = vsyncadd [#allocation3], %s555
      %s557 = sshll.u32 [#allocation2], 4
      %s558 = int_to_ptr.vmem [resolvable:$true] %s557
      %563 = dma.vmem_to_hbm [thread:$0]  %s558, 256, %s2, [#allocation3], 128, 128, 8
    $region13: #{attention_layer.1} parent=1 // pred_fallthru
      _
    // Predicated region
    $region14: #{attention_layer.1} parent=1 // pred_check
      _
    $region15: #{attention_layer.1} parent=1 // pred_check_branch
      %565 = sbr.rel (0) target = $region17
    $region16: #{attention_layer.1} parent=1 // pred_region
      %566 = dma.done [#allocation3], 256
    $region17: #{attention_layer.1} parent=1 // pred_fallthru
      _
    %567 = vsyncpa [#allocation3], 1

</llo_original>
